<compile_context>
chip_gen: v5e
topology: v5e:2x2
jax: 0.10.0
libtpu: 0.0.40
codegen_flags: <defaults>
</compile_context>

<pallas_src>
import jax
import jax.numpy as jnp
from jax.experimental import pallas as pl
from jax.experimental.pallas import tpu as pltpu


# ----------------------------------------------------------------------------
# Pallas kernel: integer-code matmul + folded per-column rescale / zp / bias
#   out[m, c] = acc[m, c] * scale[c] + rowsum[m] * (zp[c] * scale[c]) + bias[c]
# ----------------------------------------------------------------------------
def _codes_matmul_kernel(a_ref, rs_ref, w_ref, c_ref, o_ref):
    # a_ref : (TM, Kpad)   activation integer codes (bf16, exact for <=8 bit)
    # rs_ref: (TM, 1)      f32 row sums of the activation codes (precomputed)
    # w_ref : (Kpad, TN)   zero-point-shifted weight integer codes
    # c_ref : (8, TN)      row0 = scale, row1 = zp*scale, row2 = bias
    acc = jnp.dot(a_ref[...], w_ref[...], preferred_element_type=jnp.float32)
    c = c_ref[...]
    out = acc * c[0:1, :] + rs_ref[...] * c[1:2, :] + c[2:3, :]
    o_ref[...] = out.astype(o_ref.dtype)


# ----------------------------------------------------------------------------
# Helpers (plain-JAX glue)
# ----------------------------------------------------------------------------
def _round_up(x, m):
    return (x + m - 1) // m * m


def _vmem_capacity_bytes():
    try:
        return int(pltpu.get_tpu_info().vmem_capacity_bytes)
    except Exception:
        return 64 << 20          # conservative fallback (v7x per-TC capacity)


def _im2col(x, kh, kw, stride, padding):
    """NCHW -> (N*Ho*Wo, Cin*kh*kw); K flattened row-major over (Cin, kh, kw)."""
    n, c, h, w = x.shape
    xp = jnp.pad(x, ((0, 0), (0, 0), (padding, padding), (padding, padding)))
    ho = (h + 2 * padding - kh) // stride + 1
    wo = (w + 2 * padding - kw) // stride + 1
    cols = []
    for i in range(kh):
        for j in range(kw):
            cols.append(xp[:, :, i:i + stride * ho:stride, j:j + stride * wo:stride])
    pat = jnp.stack(cols, axis=2)            # (N, C, kh*kw, Ho, Wo)
    pat = pat.transpose(0, 3, 4, 1, 2)       # (N, Ho, Wo, C, kh*kw)
    return pat.reshape(n * ho * wo, c * kh * kw), ho, wo


def _quantize_bias(bias, bit=32):
    """Global min/max bias quantization with a zero-range guard."""
    b_max = jnp.max(bias)
    b_min = jnp.min(bias)
    b_range = b_max - b_min
    s = b_range / (2.0 ** bit - 1.0)
    safe_s = jnp.where(b_range == 0.0, 1.0, s)
    q = jnp.round(bias / safe_s) * s
    # NOTE: PyTorch would produce NaN for a constant bias; guarded deliberately.
    return jnp.where(b_range == 0.0, bias, q)


# ----------------------------------------------------------------------------
# Module forward (QuantMultiPrecActivConv2d, first_layer=False, fc=None)
# ----------------------------------------------------------------------------
def quant_multi_prec_activ_conv2d(x, weight, bias, alpha_activ, alpha_weight,
                                  clip_vals, abits, wbits, stride=1, padding=1):
    n, cin, h, w = x.shape
    cout, _, kh, kw = weight.shape
    K = cin * kh * kw

    # integer codes are exact in bf16 only up to 8 bits
    use_bf16 = (max(abits) <= 8) and (max(wbits) <= 8)
    code_dtype = jnp.bfloat16 if use_bf16 else jnp.float32
    elt = 2 if use_bf16 else 4

    # ---------------- QuantPaCTActiv: single selected branch -----------------
    onehot_a = jax.nn.one_hot(jnp.argmax(alpha_activ), len(abits), dtype=jnp.float32)
    n_steps_a = jnp.array([2.0 ** b - 1.0 for b in abits], jnp.float32)
    clip_sel = jnp.dot(onehot_a, clip_vals)            # scalar clip value
    nstep_sel = jnp.dot(onehot_a, n_steps_a)           # scalar 2^b - 1
    scale_sel = nstep_sel / clip_sel                   # quantization scale
    inv_act = clip_sel / nstep_sel                     # dequantization scale

    act_codes = jnp.floor(scale_sel * jnp.clip(x, 0.0, clip_sel))
    act_codes = jnp.where(jnp.isnan(act_codes), 0.0, act_codes)   # torch.nan_to_num
    act_codes = act_codes.astype(code_dtype)

    # ---------------- QuantMultiPrecConv2d weight preparation ----------------
    flat = weight.reshape(cout, -1)                    # (cout, K)
    ch_max = flat.max(axis=1)
    ch_min = flat.min(axis=1)
    ch_range = jnp.where(ch_max - ch_min == 0.0, 1.0, ch_max - ch_min)

    onehot_w = jax.nn.one_hot(jnp.argmax(alpha_weight, axis=0), len(wbits),
                              dtype=jnp.float32)       # (cout, n_wbits)
    w_shift = jnp.zeros_like(flat)                     # zero-point-shifted codes
    w_zp = jnp.zeros((cout,), jnp.float32)             # per-channel zero points
    w_scale = jnp.zeros((cout,), jnp.float32)          # per-channel S_w
    for i, bit in enumerate(wbits):
        if bit == 0:                                   # bit==0 -> weight is zero
            continue
        sel = onehot_w[:, i]                           # (cout,)
        s = ch_range / (2.0 ** bit - 1.0)              # (cout,)
        codes_b = jnp.round(flat / s[:, None])         # integer codes
        zp_b = jnp.round(ch_min / s)                   # integer zero point
        # shifted codes lie in [-1, 2^bit] <= 256 -> exact in bf16
        w_shift = w_shift + (codes_b - zp_b[:, None]) * sel[:, None]
        w_zp = w_zp + zp_b * sel
        w_scale = w_scale + s * sel

    q_bias = _quantize_bias(bias, 32)

    # ---------------- lane/sublane-dense padding ------------------------------
    cout_pad = _round_up(cout, 128)
    Kpad = _round_up(K, 128)

    w_mat = jnp.pad(w_shift.T.astype(code_dtype),
                    ((0, Kpad - K), (0, cout_pad - cout)))         # (Kpad, Cpad)

    scale_col = inv_act * w_scale                                  # (cout,)
    consts = jnp.zeros((8, cout_pad), jnp.float32)
    consts = consts.at[0, :cout].set(scale_col)                    # acc scale
    consts = consts.at[1, :cout].set(w_zp * scale_col)             # rowsum coeff
    consts = consts.at[2, :cout].set(q_bias)                       # bias

    # ---------------- im2col on the quantized activation codes ----------------
    patches, ho, wo = _im2col(act_codes, kh, kw, stride, padding)  # (M, K)
    M = patches.shape[0]
    # row sums of the activation codes, computed ONCE (exact: small integers)
    row_sum = jnp.sum(patches.astype(jnp.float32), axis=1, keepdims=True)

    # ---------------- tile selection from a generation-aware VMEM budget ------
    vmem_cap = _vmem_capacity_bytes()
    budget = max(12 << 20, min(40 << 20, vmem_cap * 3 // 8))

    def _vmem_need(tm, tn):
        return (2 * tm * Kpad * elt          # double-buffered activation codes
                + 2 * Kpad * tn * elt        # weight codes
                + 2 * tm * 4                 # row sums
                + 2 * 8 * tn * 4             # folded constants
                + 2 * tm * tn * 4)           # f32 output double buffer

    # N tile: prefer a fully VMEM-resident weight (kills redundant weight DMAs).
    tn_candidates = [cout_pad] + [t for t in (512, 256, 128)
                                  if cout_pad % t == 0 and t < cout_pad]
    TN = 128
    for t in tn_candidates:
        if _vmem_need(128, t) <= budget:
            TN = t
            break

    # M tile: minimise padding waste among 128-multiples that fit the budget.
    fit_tms = [t for t in range(128, 2048 + 1, 128) if _vmem_need(t, TN) <= budget]
    if not fit_tms:
        fit_tms = [128]
    m_ceil = _round_up(M, 128)
    if m_ceil <= fit_tms[-1]:
        TM = m_ceil
    else:
        TM = min(fit_tms, key=lambda t: (_round_up(M, t) - M, -t))
    Mpad = _round_up(M, TM)

    patches_p = jnp.pad(patches, ((0, Mpad - M), (0, Kpad - K)))
    row_sum_p = jnp.pad(row_sum, ((0, Mpad - M), (0, 0)))

    need = _vmem_need(TM, TN)
    cp_kwargs = dict(dimension_semantics=("parallel", "parallel"))
    if need > (12 << 20):
        # raise the scoped limit only when needed; stay below physical capacity
        cp_kwargs["vmem_limit_bytes"] = int(min(need + (8 << 20),
                                                vmem_cap - (8 << 20)))
    compiler_params = pltpu.CompilerParams(**cp_kwargs)

    cost = pl.CostEstimate(
        flops=2 * Mpad * Kpad * cout_pad,
        transcendentals=0,
        bytes_accessed=(Mpad * Kpad * elt + Kpad * cout_pad * elt
                        + Mpad * 4 + 8 * cout_pad * 4 + Mpad * cout_pad * 4),
    )

    out_mat = pl.pallas_call(
        _codes_matmul_kernel,
        out_shape=jax.ShapeDtypeStruct((Mpad, cout_pad), jnp.float32),
        grid=(Mpad // TM, cout_pad // TN),
        in_specs=[
            pl.BlockSpec((TM, Kpad), lambda i, j: (i, 0)),   # activation codes
            pl.BlockSpec((TM, 1),    lambda i, j: (i, 0)),   # precomputed row sums
            pl.BlockSpec((Kpad, TN), lambda i, j: (0, j)),   # weight codes (resident)
            pl.BlockSpec((8, TN),    lambda i, j: (0, j)),   # folded constants
        ],
        out_specs=pl.BlockSpec((TM, TN), lambda i, j: (i, j)),
        compiler_params=compiler_params,
        cost_estimate=cost,
    )(patches_p, row_sum_p, w_mat, consts)

    # TODO(synk): keep NHWC if downstream allows; NCHW transpose kept to match
    # the PyTorch module's output layout.
    out = out_mat[:M, :cout].reshape(n, ho, wo, cout).transpose(0, 3, 1, 2)
    return out


# ----------------------------------------------------------------------------
# Pure-JAX reference (faithful f32 replica of the PyTorch forward)
# ----------------------------------------------------------------------------
def _channel_asym_min_max_quantize_ref(w, bit):
    if bit == 0:
        return jnp.zeros_like(w)
    flat = w.reshape(w.shape[0], -1)
    ch_max = flat.max(axis=1)
    ch_min = flat.min(axis=1)
    ch_range = jnp.where(ch_max - ch_min == 0.0, 1.0, ch_max - ch_min)
    s_w = (ch_range / (2.0 ** bit - 1.0)).reshape(-1, 1, 1, 1)
    return jnp.round(w / s_w) * s_w


def _reference_forward(x, weight, bias, alpha_activ, alpha_weight,
                       clip_vals, abits, wbits, stride, padding):
    sw_act = jax.nn.one_hot(jnp.argmax(alpha_activ), len(abits), dtype=jnp.float32)
    act = jnp.zeros_like(x)
    for i, bit in enumerate(abits):
        scale = (2.0 ** bit - 1.0) / clip_vals[i]
        xq = jnp.clip(x, 0.0, clip_vals[i])
        xq = jnp.floor(scale * xq) / scale
        act = act + jnp.nan_to_num(xq) * sw_act[i]

    cout = weight.shape[0]
    sw_w = jax.nn.one_hot(jnp.argmax(alpha_weight, axis=0), len(wbits),
                          dtype=jnp.float32).T
    mix_w = jnp.zeros_like(weight)
    for i, bit in enumerate(wbits):
        qw = _channel_asym_min_max_quantize_ref(weight, bit)
        mix_w = mix_w + qw * sw_w[i].reshape(cout, 1, 1, 1)
    q_bias = _quantize_bias(bias, 32)

    out = jax.lax.conv_general_dilated(
        act, mix_w, (stride, stride), ((padding, padding), (padding, padding)),
        dimension_numbers=("NCHW", "OIHW", "NCHW"))
    return out + q_bias.reshape(1, -1, 1, 1)


if __name__ == "__main__":
    key = jax.random.PRNGKey(0)
    k1, k2, k3 = jax.random.split(key, 3)

    N, Cin, H, W = 2, 4, 16, 16
    Cout, KH, KW = 8, 3, 3
    abits = [2, 4]
    wbits = [2, 4, 8]

    x = jax.random.normal(k1, (N, Cin, H, W), jnp.float32) * 3.0
    weight = jax.random.normal(k2, (Cout, Cin, KH, KW), jnp.float32) * 0.2
    bias = jax.random.normal(k3, (Cout,), jnp.float32) * 0.1

    # deterministic parameter init (mirrors the module __init__)
    alpha_activ = jnp.full((len(abits),), 0.01, jnp.float32)        # QuantPaCTActiv
    alpha_weight = jnp.full((len(wbits), Cout), 0.01, jnp.float32)  # QuantMultiPrecConv2d
    clip_vals = jnp.full((len(abits),), 6.0, jnp.float32)           # PACT clip init

    out = quant_multi_prec_activ_conv2d(x, weight, bias, alpha_activ,
                                        alpha_weight, clip_vals, abits, wbits,
                                        stride=1, padding=1)
    out = jax.block_until_ready(out)
    assert out.shape == (N, Cout, H, W), out.shape

    ref = _reference_forward(x, weight, bias, alpha_activ, alpha_weight,
                             clip_vals, abits, wbits, 1, 1)
    assert jnp.allclose(out, ref, rtol=1e-3, atol=1e-2), \
        float(jnp.max(jnp.abs(out - ref)))

    # TODO(synk): size_product / memory_size buffer bookkeeping is a host-side
    # side effect in PyTorch and is not reproduced on-device.
    print("KERNEL_OK")
</pallas_src>

<mosaic_0001>
module attributes {stable_mosaic.version = 11 : i64} {
  func.func @_codes_matmul_kernel(%arg0: i32, %arg1: i32, %arg2: memref<512x128xbf16, #tpu.memory_space<vmem>>, %arg3: memref<512x1xf32, #tpu.memory_space<vmem>>, %arg4: memref<128x128xbf16, #tpu.memory_space<vmem>>, %arg5: memref<8x128xf32, #tpu.memory_space<vmem>>, %arg6: memref<512x128xf32, #tpu.memory_space<vmem>>) attributes {dimension_semantics = [#tpu.dimension_semantics<parallel>, #tpu.dimension_semantics<parallel>], iteration_bounds = array<i64: 1, 1>, scalar_prefetch = 0 : i64, scratch_operands = 0 : i64, tpu.core_type = #tpu.core_type<tc>, window_params = [{transform_indices = @transform_0, window_bounds = array<i64: 512, 128>}, {transform_indices = @transform_1, window_bounds = array<i64: 512, 1>}, {transform_indices = @transform_2, window_bounds = array<i64: 128, 128>}, {transform_indices = @transform_3, window_bounds = array<i64: 8, 128>}, {transform_indices = @transform_4, window_bounds = array<i64: 512, 128>}]} {
    %c0 = arith.constant 0 : index
    %c0_0 = arith.constant 0 : index
    %0 = vector.load %arg2[%c0, %c0_0] : memref<512x128xbf16, #tpu.memory_space<vmem>>, vector<512x128xbf16>
    %c0_1 = arith.constant 0 : index
    %c0_2 = arith.constant 0 : index
    %1 = vector.load %arg4[%c0_1, %c0_2] : memref<128x128xbf16, #tpu.memory_space<vmem>>, vector<128x128xbf16>
    %cst = arith.constant dense<0.000000e+00> : vector<512x128xf32>
    %2 = tpu.matmul %0, %1, %cst {dimension_numbers = #tpu.dot_dimension_numbers<[1], [0], [0], [1], [0, 0, 1, 1], [], []>} : vector<512x128xbf16>, vector<128x128xbf16>, vector<512x128xf32> -> vector<512x128xf32>
    %c0_3 = arith.constant 0 : index
    %c0_4 = arith.constant 0 : index
    %3 = vector.load %arg5[%c0_3, %c0_4] : memref<8x128xf32, #tpu.memory_space<vmem>>, vector<8x128xf32>
    %4 = vector.extract_strided_slice %3 {offsets = [0, 0], sizes = [1, 128], strides = [1, 1]} : vector<8x128xf32> to vector<1x128xf32>
    %5 = vector.broadcast %4 : vector<1x128xf32> to vector<512x128xf32>
    %6 = arith.mulf %2, %5 : vector<512x128xf32>
    %c0_5 = arith.constant 0 : index
    %c0_6 = arith.constant 0 : index
    %7 = vector.load %arg3[%c0_5, %c0_6] : memref<512x1xf32, #tpu.memory_space<vmem>>, vector<512x1xf32>
    %8 = vector.extract_strided_slice %3 {offsets = [1, 0], sizes = [1, 128], strides = [1, 1]} : vector<8x128xf32> to vector<1x128xf32>
    %9 = vector.broadcast %7 : vector<512x1xf32> to vector<512x128xf32>
    %10 = vector.broadcast %8 : vector<1x128xf32> to vector<512x128xf32>
    %11 = arith.mulf %9, %10 : vector<512x128xf32>
    %12 = arith.addf %6, %11 : vector<512x128xf32>
    %13 = vector.extract_strided_slice %3 {offsets = [2, 0], sizes = [1, 128], strides = [1, 1]} : vector<8x128xf32> to vector<1x128xf32>
    %14 = vector.broadcast %13 : vector<1x128xf32> to vector<512x128xf32>
    %15 = arith.addf %12, %14 : vector<512x128xf32>
    %c0_7 = arith.constant 0 : index
    %c0_8 = arith.constant 0 : index
    %16 = vector.load %arg6[%c0_7, %c0_8] : memref<512x128xf32, #tpu.memory_space<vmem>>, vector<512x128xf32>
    tpu.vector_store %arg6[%c0_7, %c0_8], %15 {strides = array<i32>} : memref<512x128xf32, #tpu.memory_space<vmem>>, vector<512x128xf32>,
    return
  }
  func.func @transform_0(%arg0: i32, %arg1: i32) -> (i32, i32) {
    %c0_i32 = arith.constant 0 : i32
    %c0_i32_0 = arith.constant 0 : i32
    return %arg0, %c0_i32 : i32, i32
  }
  func.func @transform_1(%arg0: i32, %arg1: i32) -> (i32, i32) {
    %c0_i32 = arith.constant 0 : i32
    %c0_i32_0 = arith.constant 0 : i32
    return %arg0, %c0_i32 : i32, i32
  }
  func.func @transform_2(%arg0: i32, %arg1: i32) -> (i32, i32) {
    %c0_i32 = arith.constant 0 : i32
    %c0_i32_0 = arith.constant 0 : i32
    return %c0_i32, %arg1 : i32, i32
  }
  func.func @transform_3(%arg0: i32, %arg1: i32) -> (i32, i32) {
    %c0_i32 = arith.constant 0 : i32
    %c0_i32_0 = arith.constant 0 : i32
    return %c0_i32, %arg1 : i32, i32
  }
  func.func @transform_4(%arg0: i32, %arg1: i32) -> (i32, i32) {
    %c0_i32 = arith.constant 0 : i32
    return %arg0, %arg1 : i32, i32
  }
}

</mosaic_0001>

<llo_original>
// kernel: tpu_custom_call.1
$region0: #{tpu_custom_call.1}
  #allocation0 [shape = 'u32[]', space=smem, size = 0x4, offset = 0x4, fixed_abs, tag = 'smem constant byte address 0x4 - core index']
  #allocation1 [shape = 'u32[72,128]{1,0:T(1,128)}', space=vmem, size = 0x9000, scoped, tag = 'internal scratch']
  %s0 = inlined_call_operand.vmem [shape: bf16[512,128], index: 0, kind: input, shape index: {}]
  %s1 = inlined_call_operand.vmem [shape: f32[512,1], index: 1, kind: input, shape index: {}]
  %s2 = inlined_call_operand.vmem [shape: bf16[128,128], index: 2, kind: input, shape index: {}]
  %s3 = inlined_call_operand.vmem [shape: f32[8,128], index: 3, kind: input, shape index: {}]
  %s4 = inlined_call_operand.hbm [shape: f32[512,128], index: 4, kind: output, shape index: {}]
  %s5 = sld [smem:[#allocation0]]
  $region26: #{tpu_custom_call.1} parent=0
    _
  %s7 = ssub.s32 1, %s5
  %s8 = scalar_select 0, %s7, %s5
  $region1: #{tpu_custom_call.1} parent=0
    #allocation2 [shape = 'u8[262144]{0}', space=vmem, size = 0x40000, scoped, tag = 'output window, operand 0, single buffered']
    #allocation3 [shape = 's32[1]{0}', space=sflag, size = 0x4, scoped, tag = 'scoped memory for tpu_custom_call.1']
    %9 = vsyncpa [#allocation3], 0
    // Predicated region
    $region2: #{tpu_custom_call.1} parent=1 // pred_check
      _
    $region3: #{tpu_custom_call.1} parent=1 // pred_check_branch
      %11 = sbr.rel (0) target = $region5
    $region4: #{tpu_custom_call.1} parent=1 // pred_region
      _
    $region5: #{tpu_custom_call.1} parent=1 // pred_fallthru
      _
    // Predicated region
    $region6: #{tpu_custom_call.1} parent=1 // pred_check
      _
    $region7: #{tpu_custom_call.1} parent=1 // pred_check_branch
      %13 = sbr.rel (0) target = $region9
    $region8: #{tpu_custom_call.1} parent=1 // pred_region
      _
    $region9: #{tpu_custom_call.1} parent=1 // pred_fallthru
      _
    // Predicated region
    $region10: #{tpu_custom_call.1} parent=1 // pred_check
      _
    $region11: #{tpu_custom_call.1} parent=1 // pred_check_branch
      %15 = sbr.rel (0) target = $region13
    $region12: #{tpu_custom_call.1} parent=1 // pred_region
      _
    $region13: #{tpu_custom_call.1} parent=1 // pred_fallthru
      _
    // Predicated region
    $region14: #{tpu_custom_call.1} parent=1 // pred_check
      _
    $region15: #{tpu_custom_call.1} parent=1 // pred_check_branch
      %17 = sbr.rel (0) target = $region17
    $region16: #{tpu_custom_call.1} parent=1 // pred_region
      _
    $region17: #{tpu_custom_call.1} parent=1 // pred_fallthru
      _
    %v18 = vld [vmem:[%s0] sm:$0xf]
    %v19 = vld [vmem:[%s0 + $0x4] sm:$0xf]
    %v20 = vld [vmem:[%s0 + $0x8] sm:$0xf]
    %v21 = vld [vmem:[%s0 + $0xc] sm:$0xf]
    %v22 = vld [vmem:[%s0 + $0x10] sm:$0xf]
    %v23 = vld [vmem:[%s0 + $0x14] sm:$0xf]
    %v24 = vld [vmem:[%s0 + $0x18] sm:$0xf]
    %v25 = vld [vmem:[%s0 + $0x1c] sm:$0xf]
    %v26 = vld [vmem:[%s0 + $0x20] sm:$0xf]
    %v27 = vld [vmem:[%s0 + $0x24] sm:$0xf]
    %v28 = vld [vmem:[%s0 + $0x28] sm:$0xf]
    %v29 = vld [vmem:[%s0 + $0x2c] sm:$0xf]
    %v30 = vld [vmem:[%s0 + $0x30] sm:$0xf]
    %v31 = vld [vmem:[%s0 + $0x34] sm:$0xf]
    %v32 = vld [vmem:[%s0 + $0x38] sm:$0xf]
    %v33 = vld [vmem:[%s0 + $0x3c] sm:$0xf]
    %v34 = vld [vmem:[%s0 + $0x40] sm:$0xf]
    %v35 = vld [vmem:[%s0 + $0x44] sm:$0xf]
    %v36 = vld [vmem:[%s0 + $0x48] sm:$0xf]
    %v37 = vld [vmem:[%s0 + $0x4c] sm:$0xf]
    %v38 = vld [vmem:[%s0 + $0x50] sm:$0xf]
    %v39 = vld [vmem:[%s0 + $0x54] sm:$0xf]
    %v40 = vld [vmem:[%s0 + $0x58] sm:$0xf]
    %v41 = vld [vmem:[%s0 + $0x5c] sm:$0xf]
    %v42 = vld [vmem:[%s0 + $0x60] sm:$0xf]
    %v43 = vld [vmem:[%s0 + $0x64] sm:$0xf]
    %v44 = vld [vmem:[%s0 + $0x68] sm:$0xf]
    %v45 = vld [vmem:[%s0 + $0x6c] sm:$0xf]
    %v46 = vld [vmem:[%s0 + $0x70] sm:$0xf]
    %v47 = vld [vmem:[%s0 + $0x74] sm:$0xf]
    %v48 = vld [vmem:[%s0 + $0x78] sm:$0xf]
    %v49 = vld [vmem:[%s0 + $0x7c] sm:$0xf]
    %v50 = vld [vmem:[%s0 + $0x80] sm:$0xf]
    %v51 = vld [vmem:[%s0 + $0x84] sm:$0xf]
    %v52 = vld [vmem:[%s0 + $0x88] sm:$0xf]
    %v53 = vld [vmem:[%s0 + $0x8c] sm:$0xf]
    %v54 = vld [vmem:[%s0 + $0x90] sm:$0xf]
    %v55 = vld [vmem:[%s0 + $0x94] sm:$0xf]
    %v56 = vld [vmem:[%s0 + $0x98] sm:$0xf]
    %v57 = vld [vmem:[%s0 + $0x9c] sm:$0xf]
    %v58 = vld [vmem:[%s0 + $0xa0] sm:$0xf]
    %v59 = vld [vmem:[%s0 + $0xa4] sm:$0xf]
    %v60 = vld [vmem:[%s0 + $0xa8] sm:$0xf]
    %v61 = vld [vmem:[%s0 + $0xac] sm:$0xf]
    %v62 = vld [vmem:[%s0 + $0xb0] sm:$0xf]
    %v63 = vld [vmem:[%s0 + $0xb4] sm:$0xf]
    %v64 = vld [vmem:[%s0 + $0xb8] sm:$0xf]
    %v65 = vld [vmem:[%s0 + $0xbc] sm:$0xf]
    %v66 = vld [vmem:[%s0 + $0xc0] sm:$0xf]
    %v67 = vld [vmem:[%s0 + $0xc4] sm:$0xf]
    %v68 = vld [vmem:[%s0 + $0xc8] sm:$0xf]
    %v69 = vld [vmem:[%s0 + $0xcc] sm:$0xf]
    %v70 = vld [vmem:[%s0 + $0xd0] sm:$0xf]
    %v71 = vld [vmem:[%s0 + $0xd4] sm:$0xf]
    %v72 = vld [vmem:[%s0 + $0xd8] sm:$0xf]
    %v73 = vld [vmem:[%s0 + $0xdc] sm:$0xf]
    %v74 = vld [vmem:[%s0 + $0xe0] sm:$0xf]
    %v75 = vld [vmem:[%s0 + $0xe4] sm:$0xf]
    %v76 = vld [vmem:[%s0 + $0xe8] sm:$0xf]
    %v77 = vld [vmem:[%s0 + $0xec] sm:$0xf]
    %v78 = vld [vmem:[%s0 + $0xf0] sm:$0xf]
    %v79 = vld [vmem:[%s0 + $0xf4] sm:$0xf]
    %v80 = vld [vmem:[%s0 + $0xf8] sm:$0xf]
    %v81 = vld [vmem:[%s0 + $0xfc] sm:$0xf]
    %v82 = vld [vmem:[%s2] sm:$0xf]
    %v83 = vld [vmem:[%s2 + $0x4] sm:$0xf]
    %v84 = vld [vmem:[%s2 + $0x8] sm:$0xf]
    %v85 = vld [vmem:[%s2 + $0xc] sm:$0xf]
    %v86 = vld [vmem:[%s2 + $0x10] sm:$0xf]
    %v87 = vld [vmem:[%s2 + $0x14] sm:$0xf]
    %v88 = vld [vmem:[%s2 + $0x18] sm:$0xf]
    %v89 = vld [vmem:[%s2 + $0x1c] sm:$0xf]
    %v90 = vld [vmem:[%s2 + $0x20] sm:$0xf]
    %v91 = vld [vmem:[%s2 + $0x24] sm:$0xf]
    %v92 = vld [vmem:[%s2 + $0x28] sm:$0xf]
    %v93 = vld [vmem:[%s2 + $0x2c] sm:$0xf]
    %v94 = vld [vmem:[%s2 + $0x30] sm:$0xf]
    %v95 = vld [vmem:[%s2 + $0x34] sm:$0xf]
    %v96 = vld [vmem:[%s2 + $0x38] sm:$0xf]
    %v97 = vld [vmem:[%s2 + $0x3c] sm:$0xf]
    %v162 = vunpack.c.l.b16 %v18
    %v163 = vunpack.c.l.b16 %v19
    %v164 = vunpack.c.l.b16 %v20
    %v165 = vunpack.c.l.b16 %v21
    %v166 = vunpack.c.l.b16 %v22
    %v167 = vunpack.c.l.b16 %v23
    %v168 = vunpack.c.l.b16 %v24
    %v169 = vunpack.c.l.b16 %v25
    %v170 = vunpack.c.l.b16 %v26
    %v171 = vunpack.c.l.b16 %v27
    %v172 = vunpack.c.l.b16 %v28
    %v173 = vunpack.c.l.b16 %v29
    %v174 = vunpack.c.l.b16 %v30
    %v175 = vunpack.c.l.b16 %v31
    %v176 = vunpack.c.l.b16 %v32
    %v177 = vunpack.c.l.b16 %v33
    %v178 = vunpack.c.l.b16 %v34
    %v179 = vunpack.c.l.b16 %v35
    %v180 = vunpack.c.l.b16 %v36
    %v181 = vunpack.c.l.b16 %v37
    %v182 = vunpack.c.l.b16 %v38
    %v183 = vunpack.c.l.b16 %v39
    %v184 = vunpack.c.l.b16 %v40
    %v185 = vunpack.c.l.b16 %v41
    %v186 = vunpack.c.l.b16 %v42
    %v187 = vunpack.c.l.b16 %v43
    %v188 = vunpack.c.l.b16 %v44
    %v189 = vunpack.c.l.b16 %v45
    %v190 = vunpack.c.l.b16 %v46
    %v191 = vunpack.c.l.b16 %v47
    %v192 = vunpack.c.l.b16 %v48
    %v193 = vunpack.c.l.b16 %v49
    %v194 = vunpack.c.l.b16 %v50
    %v195 = vunpack.c.l.b16 %v51
    %v196 = vunpack.c.l.b16 %v52
    %v197 = vunpack.c.l.b16 %v53
    %v198 = vunpack.c.l.b16 %v54
    %v199 = vunpack.c.l.b16 %v55
    %v200 = vunpack.c.l.b16 %v56
    %v201 = vunpack.c.l.b16 %v57
    %v202 = vunpack.c.l.b16 %v58
    %v203 = vunpack.c.l.b16 %v59
    %v204 = vunpack.c.l.b16 %v60
    %v205 = vunpack.c.l.b16 %v61
    %v206 = vunpack.c.l.b16 %v62
    %v207 = vunpack.c.l.b16 %v63
    %v208 = vunpack.c.l.b16 %v64
    %v209 = vunpack.c.l.b16 %v65
    %v210 = vunpack.c.l.b16 %v66
    %v211 = vunpack.c.l.b16 %v67
    %v212 = vunpack.c.l.b16 %v68
    %v213 = vunpack.c.l.b16 %v69
    %v214 = vunpack.c.l.b16 %v70
    %v215 = vunpack.c.l.b16 %v71
    %v216 = vunpack.c.l.b16 %v72
    %v217 = vunpack.c.l.b16 %v73
    %v218 = vunpack.c.l.b16 %v74
    %v219 = vunpack.c.l.b16 %v75
    %v220 = vunpack.c.l.b16 %v76
    %v221 = vunpack.c.l.b16 %v77
    %v222 = vunpack.c.l.b16 %v78
    %v223 = vunpack.c.l.b16 %v79
    %v224 = vunpack.c.l.b16 %v80
    %v225 = vunpack.c.l.b16 %v81
    %v226 = vpack.c.b16 %v163, %v162
    %v227 = vpack.c.b16 %v165, %v164
    %v228 = vpack.c.b16 %v167, %v166
    %v229 = vpack.c.b16 %v169, %v168
    %v230 = vpack.c.b16 %v171, %v170
    %v231 = vpack.c.b16 %v173, %v172
    %v232 = vpack.c.b16 %v175, %v174
    %v233 = vpack.c.b16 %v177, %v176
    %v234 = vpack.c.b16 %v179, %v178
    %v235 = vpack.c.b16 %v181, %v180
    %v236 = vpack.c.b16 %v183, %v182
    %v237 = vpack.c.b16 %v185, %v184
    %v238 = vpack.c.b16 %v187, %v186
    %v239 = vpack.c.b16 %v189, %v188
    %v240 = vpack.c.b16 %v191, %v190
    %v241 = vpack.c.b16 %v193, %v192
    %v242 = vpack.c.b16 %v195, %v194
    %v243 = vpack.c.b16 %v197, %v196
    %v244 = vpack.c.b16 %v199, %v198
    %v245 = vpack.c.b16 %v201, %v200
    %v246 = vpack.c.b16 %v203, %v202
    %v247 = vpack.c.b16 %v205, %v204
    %v248 = vpack.c.b16 %v207, %v206
    %v249 = vpack.c.b16 %v209, %v208
    %v250 = vpack.c.b16 %v211, %v210
    %v251 = vpack.c.b16 %v213, %v212
    %v252 = vpack.c.b16 %v215, %v214
    %v253 = vpack.c.b16 %v217, %v216
    %v254 = vpack.c.b16 %v219, %v218
    %v255 = vpack.c.b16 %v221, %v220
    %v256 = vpack.c.b16 %v223, %v222
    %v257 = vpack.c.b16 %v225, %v224
    %v306 = vunpack.c.l.b16 %v82
    %v307 = vunpack.c.l.b16 %v83
    %v308 = vunpack.c.l.b16 %v84
    %v309 = vunpack.c.l.b16 %v85
    %v310 = vunpack.c.l.b16 %v86
    %v311 = vunpack.c.l.b16 %v87
    %v312 = vunpack.c.l.b16 %v88
    %v313 = vunpack.c.l.b16 %v89
    %v314 = vunpack.c.l.b16 %v90
    %v315 = vunpack.c.l.b16 %v91
    %v316 = vunpack.c.l.b16 %v92
    %v317 = vunpack.c.l.b16 %v93
    %v318 = vunpack.c.l.b16 %v94
    %v319 = vunpack.c.l.b16 %v95
    %v320 = vunpack.c.l.b16 %v96
    %v321 = vunpack.c.l.b16 %v97
    %v322 = vpack.c.b16 %v307, %v306
    %v323 = vpack.c.b16 %v309, %v308
    %v324 = vpack.c.b16 %v311, %v310
    %v325 = vpack.c.b16 %v313, %v312
    %v326 = vpack.c.b16 %v315, %v314
    %v327 = vpack.c.b16 %v317, %v316
    %v328 = vpack.c.b16 %v319, %v318
    %v329 = vpack.c.b16 %v321, %v320
    %338 = vmatpush.bf16.msra.mxu0 %v329
    %339 = vmatpush.bf16.msra.mxu0 %v328
    %340 = vmatpush.bf16.msra.mxu0 %v327
    %341 = vmatpush.bf16.msra.mxu0 %v326
    %342 = vmatpush.bf16.msra.mxu0 %v325
    %343 = vmatpush.bf16.msra.mxu0 %v324
    %344 = vmatpush.bf16.msra.mxu0 %v323
    %345 = vmatpush.bf16.msra.mxu0 %v322
    %346 = vmatmul.bf16.gmra.mxu0 %v226
    %v347 = vpop.f32.mrf.mxu0
    %v348 = vadd.f32 0.0, %v347
    %v349 = vpop.f32.mrf.mxu0
    %v350 = vadd.f32 0.0, %v349
    %351 = vmatmul.bf16.gmra.mxu0 %v227
    %v352 = vpop.f32.mrf.mxu0
    %v353 = vadd.f32 0.0, %v352
    %v354 = vpop.f32.mrf.mxu0
    %v355 = vadd.f32 0.0, %v354
    %356 = vmatmul.bf16.gmra.mxu0 %v228
    %v357 = vpop.f32.mrf.mxu0
    %v358 = vadd.f32 0.0, %v357
    %v359 = vpop.f32.mrf.mxu0
    %v360 = vadd.f32 0.0, %v359
    %361 = vmatmul.bf16.gmra.mxu0 %v229
    %v362 = vpop.f32.mrf.mxu0
    %v363 = vadd.f32 0.0, %v362
    %v364 = vpop.f32.mrf.mxu0
    %v365 = vadd.f32 0.0, %v364
    %366 = vmatmul.bf16.gmra.mxu0 %v230
    %v367 = vpop.f32.mrf.mxu0
    %v368 = vadd.f32 0.0, %v367
    %v369 = vpop.f32.mrf.mxu0
    %v370 = vadd.f32 0.0, %v369
    %371 = vmatmul.bf16.gmra.mxu0 %v231
    %v372 = vpop.f32.mrf.mxu0
    %v373 = vadd.f32 0.0, %v372
    %v374 = vpop.f32.mrf.mxu0
    %v375 = vadd.f32 0.0, %v374
    %376 = vmatmul.bf16.gmra.mxu0 %v232
    %v377 = vpop.f32.mrf.mxu0
    %v378 = vadd.f32 0.0, %v377
    %v379 = vpop.f32.mrf.mxu0
    %v380 = vadd.f32 0.0, %v379
    %381 = vmatmul.bf16.gmra.mxu0 %v233
    %v382 = vpop.f32.mrf.mxu0
    %v383 = vadd.f32 0.0, %v382
    %v384 = vpop.f32.mrf.mxu0
    %v385 = vadd.f32 0.0, %v384
    %386 = vmatmul.bf16.gmra.mxu0 %v234
    %v387 = vpop.f32.mrf.mxu0
    %v388 = vadd.f32 0.0, %v387
    %v389 = vpop.f32.mrf.mxu0
    %v390 = vadd.f32 0.0, %v389
    %391 = vmatmul.bf16.gmra.mxu0 %v235
    %v392 = vpop.f32.mrf.mxu0
    %v393 = vadd.f32 0.0, %v392
    %v394 = vpop.f32.mrf.mxu0
    %v395 = vadd.f32 0.0, %v394
    %396 = vmatmul.bf16.gmra.mxu0 %v236
    %v397 = vpop.f32.mrf.mxu0
    %v398 = vadd.f32 0.0, %v397
    %v399 = vpop.f32.mrf.mxu0
    %v400 = vadd.f32 0.0, %v399
    %401 = vmatmul.bf16.gmra.mxu0 %v237
    %v402 = vpop.f32.mrf.mxu0
    %v403 = vadd.f32 0.0, %v402
    %v404 = vpop.f32.mrf.mxu0
    %v405 = vadd.f32 0.0, %v404
    %406 = vmatmul.bf16.gmra.mxu0 %v238
    %v407 = vpop.f32.mrf.mxu0
    %v408 = vadd.f32 0.0, %v407
    %v409 = vpop.f32.mrf.mxu0
    %v410 = vadd.f32 0.0, %v409
    %411 = vmatmul.bf16.gmra.mxu0 %v239
    %v412 = vpop.f32.mrf.mxu0
    %v413 = vadd.f32 0.0, %v412
    %v414 = vpop.f32.mrf.mxu0
    %v415 = vadd.f32 0.0, %v414
    %416 = vmatmul.bf16.gmra.mxu0 %v240
    %v417 = vpop.f32.mrf.mxu0
    %v418 = vadd.f32 0.0, %v417
    %v419 = vpop.f32.mrf.mxu0
    %v420 = vadd.f32 0.0, %v419
    %421 = vmatmul.bf16.gmra.mxu0 %v241
    %v422 = vpop.f32.mrf.mxu0
    %v423 = vadd.f32 0.0, %v422
    %v424 = vpop.f32.mrf.mxu0
    %v425 = vadd.f32 0.0, %v424
    %426 = vmatmul.bf16.gmra.mxu0 %v242
    %v427 = vpop.f32.mrf.mxu0
    %v428 = vadd.f32 0.0, %v427
    %v429 = vpop.f32.mrf.mxu0
    %v430 = vadd.f32 0.0, %v429
    %431 = vmatmul.bf16.gmra.mxu0 %v243
    %v432 = vpop.f32.mrf.mxu0
    %v433 = vadd.f32 0.0, %v432
    %v434 = vpop.f32.mrf.mxu0
    %v435 = vadd.f32 0.0, %v434
    %436 = vmatmul.bf16.gmra.mxu0 %v244
    %v437 = vpop.f32.mrf.mxu0
    %v438 = vadd.f32 0.0, %v437
    %v439 = vpop.f32.mrf.mxu0
    %v440 = vadd.f32 0.0, %v439
    %441 = vmatmul.bf16.gmra.mxu0 %v245
    %v442 = vpop.f32.mrf.mxu0
    %v443 = vadd.f32 0.0, %v442
    %v444 = vpop.f32.mrf.mxu0
    %v445 = vadd.f32 0.0, %v444
    %446 = vmatmul.bf16.gmra.mxu0 %v246
    %v447 = vpop.f32.mrf.mxu0
    %v448 = vadd.f32 0.0, %v447
    %v449 = vpop.f32.mrf.mxu0
    %v450 = vadd.f32 0.0, %v449
    %451 = vmatmul.bf16.gmra.mxu0 %v247
    %v452 = vpop.f32.mrf.mxu0
    %v453 = vadd.f32 0.0, %v452
    %v454 = vpop.f32.mrf.mxu0
    %v455 = vadd.f32 0.0, %v454
    %456 = vmatmul.bf16.gmra.mxu0 %v248
    %v457 = vpop.f32.mrf.mxu0
    %v458 = vadd.f32 0.0, %v457
    %v459 = vpop.f32.mrf.mxu0
    %v460 = vadd.f32 0.0, %v459
    %461 = vmatmul.bf16.gmra.mxu0 %v249
    %v462 = vpop.f32.mrf.mxu0
    %v463 = vadd.f32 0.0, %v462
    %v464 = vpop.f32.mrf.mxu0
    %v465 = vadd.f32 0.0, %v464
    %466 = vmatmul.bf16.gmra.mxu0 %v250
    %v467 = vpop.f32.mrf.mxu0
    %v468 = vadd.f32 0.0, %v467
    %v469 = vpop.f32.mrf.mxu0
    %v470 = vadd.f32 0.0, %v469
    %471 = vmatmul.bf16.gmra.mxu0 %v251
    %v472 = vpop.f32.mrf.mxu0
    %v473 = vadd.f32 0.0, %v472
    %v474 = vpop.f32.mrf.mxu0
    %v475 = vadd.f32 0.0, %v474
    %476 = vmatmul.bf16.gmra.mxu0 %v252
    %v477 = vpop.f32.mrf.mxu0
    %v478 = vadd.f32 0.0, %v477
    %v479 = vpop.f32.mrf.mxu0
    %v480 = vadd.f32 0.0, %v479
    %481 = vmatmul.bf16.gmra.mxu0 %v253
    %v482 = vpop.f32.mrf.mxu0
    %v483 = vadd.f32 0.0, %v482
    %v484 = vpop.f32.mrf.mxu0
    %v485 = vadd.f32 0.0, %v484
    %486 = vmatmul.bf16.gmra.mxu0 %v254
    %v487 = vpop.f32.mrf.mxu0
    %v488 = vadd.f32 0.0, %v487
    %v489 = vpop.f32.mrf.mxu0
    %v490 = vadd.f32 0.0, %v489
    %491 = vmatmul.bf16.gmra.mxu0 %v255
    %v492 = vpop.f32.mrf.mxu0
    %v493 = vadd.f32 0.0, %v492
    %v494 = vpop.f32.mrf.mxu0
    %v495 = vadd.f32 0.0, %v494
    %496 = vmatmul.bf16.gmra.mxu0 %v256
    %v497 = vpop.f32.mrf.mxu0
    %v498 = vadd.f32 0.0, %v497
    %v499 = vpop.f32.mrf.mxu0
    %v500 = vadd.f32 0.0, %v499
    %501 = vmatmul.bf16.gmra.mxu0 %v257
    %v502 = vpop.f32.mrf.mxu0
    %v503 = vadd.f32 0.0, %v502
    %v504 = vpop.f32.mrf.mxu0
    %v505 = vadd.f32 0.0, %v504
    %506 = vdwg.mxu0
    %v507 = vld [vmem:[%s3] sm:$0xff]
    %v508 = vperm.slane %v507, 0
    %v509 = vmul.f32 %v348, %v508
    %v510 = vmul.f32 %v350, %v508
    %v511 = vmul.f32 %v353, %v508
    %v512 = vmul.f32 %v355, %v508
    %v513 = vmul.f32 %v358, %v508
    %v514 = vmul.f32 %v360, %v508
    %v515 = vmul.f32 %v363, %v508
    %v516 = vmul.f32 %v365, %v508
    %v517 = vmul.f32 %v368, %v508
    %v518 = vmul.f32 %v370, %v508
    %v519 = vmul.f32 %v373, %v508
    %v520 = vmul.f32 %v375, %v508
    %v521 = vmul.f32 %v378, %v508
    %v522 = vmul.f32 %v380, %v508
    %v523 = vmul.f32 %v383, %v508
    %v524 = vmul.f32 %v385, %v508
    %v525 = vmul.f32 %v388, %v508
    %v526 = vmul.f32 %v390, %v508
    %v527 = vmul.f32 %v393, %v508
    %v528 = vmul.f32 %v395, %v508
    %v529 = vmul.f32 %v398, %v508
    %v530 = vmul.f32 %v400, %v508
    %v531 = vmul.f32 %v403, %v508
    %v532 = vmul.f32 %v405, %v508
    %v533 = vmul.f32 %v408, %v508
    %v534 = vmul.f32 %v410, %v508
    %v535 = vmul.f32 %v413, %v508
    %v536 = vmul.f32 %v415, %v508
    %v537 = vmul.f32 %v418, %v508
    %v538 = vmul.f32 %v420, %v508
    %v539 = vmul.f32 %v423, %v508
    %v540 = vmul.f32 %v425, %v508
    %v541 = vmul.f32 %v428, %v508
    %v542 = vmul.f32 %v430, %v508
    %v543 = vmul.f32 %v433, %v508
    %v544 = vmul.f32 %v435, %v508
    %v545 = vmul.f32 %v438, %v508
    %v546 = vmul.f32 %v440, %v508
    %v547 = vmul.f32 %v443, %v508
    %v548 = vmul.f32 %v445, %v508
    %v549 = vmul.f32 %v448, %v508
    %v550 = vmul.f32 %v450, %v508
    %v551 = vmul.f32 %v453, %v508
    %v552 = vmul.f32 %v455, %v508
    %v553 = vmul.f32 %v458, %v508
    %v554 = vmul.f32 %v460, %v508
    %v555 = vmul.f32 %v463, %v508
    %v556 = vmul.f32 %v465, %v508
    %v557 = vmul.f32 %v468, %v508
    %v558 = vmul.f32 %v470, %v508
    %v559 = vmul.f32 %v473, %v508
    %v560 = vmul.f32 %v475, %v508
    %v561 = vmul.f32 %v478, %v508
    %v562 = vmul.f32 %v480, %v508
    %v563 = vmul.f32 %v483, %v508
    %v564 = vmul.f32 %v485, %v508
    %v565 = vmul.f32 %v488, %v508
    %v566 = vmul.f32 %v490, %v508
    %v567 = vmul.f32 %v493, %v508
    %v568 = vmul.f32 %v495, %v508
    %v569 = vmul.f32 %v498, %v508
    %v570 = vmul.f32 %v500, %v508
    %v571 = vmul.f32 %v503, %v508
    %v572 = vmul.f32 %v505, %v508
    %v573 = vld [vmem:[%s1] sm:$0xff]
    %v574 = vld [vmem:[%s1 + $0x8] sm:$0xff]
    %v575 = vld [vmem:[%s1 + $0x10] sm:$0xff]
    %v576 = vld [vmem:[%s1 + $0x18] sm:$0xff]
    %v577 = vld [vmem:[%s1 + $0x20] sm:$0xff]
    %v578 = vld [vmem:[%s1 + $0x28] sm:$0xff]
    %v579 = vld [vmem:[%s1 + $0x30] sm:$0xff]
    %v580 = vld [vmem:[%s1 + $0x38] sm:$0xff]
    %v581 = vld [vmem:[%s1 + $0x40] sm:$0xff]
    %v582 = vld [vmem:[%s1 + $0x48] sm:$0xff]
    %v583 = vld [vmem:[%s1 + $0x50] sm:$0xff]
    %v584 = vld [vmem:[%s1 + $0x58] sm:$0xff]
    %v585 = vld [vmem:[%s1 + $0x60] sm:$0xff]
    %v586 = vld [vmem:[%s1 + $0x68] sm:$0xff]
    %v587 = vld [vmem:[%s1 + $0x70] sm:$0xff]
    %v588 = vld [vmem:[%s1 + $0x78] sm:$0xff]
    %v589 = vld [vmem:[%s1 + $0x80] sm:$0xff]
    %v590 = vld [vmem:[%s1 + $0x88] sm:$0xff]
    %v591 = vld [vmem:[%s1 + $0x90] sm:$0xff]
    %v592 = vld [vmem:[%s1 + $0x98] sm:$0xff]
    %v593 = vld [vmem:[%s1 + $0xa0] sm:$0xff]
    %v594 = vld [vmem:[%s1 + $0xa8] sm:$0xff]
    %v595 = vld [vmem:[%s1 + $0xb0] sm:$0xff]
    %v596 = vld [vmem:[%s1 + $0xb8] sm:$0xff]
    %v597 = vld [vmem:[%s1 + $0xc0] sm:$0xff]
    %v598 = vld [vmem:[%s1 + $0xc8] sm:$0xff]
    %v599 = vld [vmem:[%s1 + $0xd0] sm:$0xff]
    %v600 = vld [vmem:[%s1 + $0xd8] sm:$0xff]
    %v601 = vld [vmem:[%s1 + $0xe0] sm:$0xff]
    %v602 = vld [vmem:[%s1 + $0xe8] sm:$0xff]
    %v603 = vld [vmem:[%s1 + $0xf0] sm:$0xff]
    %v604 = vld [vmem:[%s1 + $0xf8] sm:$0xff]
    %v605 = vld [vmem:[%s1 + $0x100] sm:$0xff]
    %v606 = vld [vmem:[%s1 + $0x108] sm:$0xff]
    %v607 = vld [vmem:[%s1 + $0x110] sm:$0xff]
    %v608 = vld [vmem:[%s1 + $0x118] sm:$0xff]
    %v609 = vld [vmem:[%s1 + $0x120] sm:$0xff]
    %v610 = vld [vmem:[%s1 + $0x128] sm:$0xff]
    %v611 = vld [vmem:[%s1 + $0x130] sm:$0xff]
    %v612 = vld [vmem:[%s1 + $0x138] sm:$0xff]
    %v613 = vld [vmem:[%s1 + $0x140] sm:$0xff]
    %v614 = vld [vmem:[%s1 + $0x148] sm:$0xff]
    %v615 = vld [vmem:[%s1 + $0x150] sm:$0xff]
    %v616 = vld [vmem:[%s1 + $0x158] sm:$0xff]
    %v617 = vld [vmem:[%s1 + $0x160] sm:$0xff]
    %v618 = vld [vmem:[%s1 + $0x168] sm:$0xff]
    %v619 = vld [vmem:[%s1 + $0x170] sm:$0xff]
    %v620 = vld [vmem:[%s1 + $0x178] sm:$0xff]
    %v621 = vld [vmem:[%s1 + $0x180] sm:$0xff]
    %v622 = vld [vmem:[%s1 + $0x188] sm:$0xff]
    %v623 = vld [vmem:[%s1 + $0x190] sm:$0xff]
    %v624 = vld [vmem:[%s1 + $0x198] sm:$0xff]
    %v625 = vld [vmem:[%s1 + $0x1a0] sm:$0xff]
    %v626 = vld [vmem:[%s1 + $0x1a8] sm:$0xff]
    %v627 = vld [vmem:[%s1 + $0x1b0] sm:$0xff]
    %v628 = vld [vmem:[%s1 + $0x1b8] sm:$0xff]
    %v629 = vld [vmem:[%s1 + $0x1c0] sm:$0xff]
    %v630 = vld [vmem:[%s1 + $0x1c8] sm:$0xff]
    %v631 = vld [vmem:[%s1 + $0x1d0] sm:$0xff]
    %v632 = vld [vmem:[%s1 + $0x1d8] sm:$0xff]
    %v633 = vld [vmem:[%s1 + $0x1e0] sm:$0xff]
    %v634 = vld [vmem:[%s1 + $0x1e8] sm:$0xff]
    %v635 = vld [vmem:[%s1 + $0x1f0] sm:$0xff]
    %v636 = vld [vmem:[%s1 + $0x1f8] sm:$0xff]
    %638 = vset.pattern.permute.xlu0 0
    %639 = vperm.xlu0 %638, %v573
    %v640 = vpop.permute.xlu0 %639
    %643 = vset.pattern.permute.xlu0 0
    %644 = vperm.xlu0 %643, %v574
    %v645 = vpop.permute.xlu0 %644
    %648 = vset.pattern.permute.xlu0 0
    %649 = vperm.xlu0 %648, %v575
    %v650 = vpop.permute.xlu0 %649
    %653 = vset.pattern.permute.xlu0 0
    %654 = vperm.xlu0 %653, %v576
    %v655 = vpop.permute.xlu0 %654
    %658 = vset.pattern.permute.xlu0 0
    %659 = vperm.xlu0 %658, %v577
    %v660 = vpop.permute.xlu0 %659
    %663 = vset.pattern.permute.xlu0 0
    %664 = vperm.xlu0 %663, %v578
    %v665 = vpop.permute.xlu0 %664
    %668 = vset.pattern.permute.xlu0 0
    %669 = vperm.xlu0 %668, %v579
    %v670 = vpop.permute.xlu0 %669
    %673 = vset.pattern.permute.xlu0 0
    %674 = vperm.xlu0 %673, %v580
    %v675 = vpop.permute.xlu0 %674
    %678 = vset.pattern.permute.xlu0 0
    %679 = vperm.xlu0 %678, %v581
    %v680 = vpop.permute.xlu0 %679
    %683 = vset.pattern.permute.xlu0 0
    %684 = vperm.xlu0 %683, %v582
    %v685 = vpop.permute.xlu0 %684
    %688 = vset.pattern.permute.xlu0 0
    %689 = vperm.xlu0 %688, %v583
    %v690 = vpop.permute.xlu0 %689
    %693 = vset.pattern.permute.xlu0 0
    %694 = vperm.xlu0 %693, %v584
    %v695 = vpop.permute.xlu0 %694
    %698 = vset.pattern.permute.xlu0 0
    %699 = vperm.xlu0 %698, %v585
    %v700 = vpop.permute.xlu0 %699
    %703 = vset.pattern.permute.xlu0 0
    %704 = vperm.xlu0 %703, %v586
    %v705 = vpop.permute.xlu0 %704
    %708 = vset.pattern.permute.xlu0 0
    %709 = vperm.xlu0 %708, %v587
    %v710 = vpop.permute.xlu0 %709
    %713 = vset.pattern.permute.xlu0 0
    %714 = vperm.xlu0 %713, %v588
    %v715 = vpop.permute.xlu0 %714
    %718 = vset.pattern.permute.xlu0 0
    %719 = vperm.xlu0 %718, %v589
    %v720 = vpop.permute.xlu0 %719
    %723 = vset.pattern.permute.xlu0 0
    %724 = vperm.xlu0 %723, %v590
    %v725 = vpop.permute.xlu0 %724
    %728 = vset.pattern.permute.xlu0 0
    %729 = vperm.xlu0 %728, %v591
    %v730 = vpop.permute.xlu0 %729
    %733 = vset.pattern.permute.xlu0 0
    %734 = vperm.xlu0 %733, %v592
    %v735 = vpop.permute.xlu0 %734
    %738 = vset.pattern.permute.xlu0 0
    %739 = vperm.xlu0 %738, %v593
    %v740 = vpop.permute.xlu0 %739
    %743 = vset.pattern.permute.xlu0 0
    %744 = vperm.xlu0 %743, %v594
    %v745 = vpop.permute.xlu0 %744
    %748 = vset.pattern.permute.xlu0 0
    %749 = vperm.xlu0 %748, %v595
    %v750 = vpop.permute.xlu0 %749
    %753 = vset.pattern.permute.xlu0 0
    %754 = vperm.xlu0 %753, %v596
    %v755 = vpop.permute.xlu0 %754
    %758 = vset.pattern.permute.xlu0 0
    %759 = vperm.xlu0 %758, %v597
    %v760 = vpop.permute.xlu0 %759
    %763 = vset.pattern.permute.xlu0 0
    %764 = vperm.xlu0 %763, %v598
    %v765 = vpop.permute.xlu0 %764
    %768 = vset.pattern.permute.xlu0 0
    %769 = vperm.xlu0 %768, %v599
    %v770 = vpop.permute.xlu0 %769
    %773 = vset.pattern.permute.xlu0 0
    %774 = vperm.xlu0 %773, %v600
    %v775 = vpop.permute.xlu0 %774
    %778 = vset.pattern.permute.xlu0 0
    %779 = vperm.xlu0 %778, %v601
    %v780 = vpop.permute.xlu0 %779
    %783 = vset.pattern.permute.xlu0 0
    %784 = vperm.xlu0 %783, %v602
    %v785 = vpop.permute.xlu0 %784
    %788 = vset.pattern.permute.xlu0 0
    %789 = vperm.xlu0 %788, %v603
    %v790 = vpop.permute.xlu0 %789
    %793 = vset.pattern.permute.xlu0 0
    %794 = vperm.xlu0 %793, %v604
    %v795 = vpop.permute.xlu0 %794
    %798 = vset.pattern.permute.xlu0 0
    %799 = vperm.xlu0 %798, %v605
    %v800 = vpop.permute.xlu0 %799
    %803 = vset.pattern.permute.xlu0 0
    %804 = vperm.xlu0 %803, %v606
    %v805 = vpop.permute.xlu0 %804
    %808 = vset.pattern.permute.xlu0 0
    %809 = vperm.xlu0 %808, %v607
    %v810 = vpop.permute.xlu0 %809
    %813 = vset.pattern.permute.xlu0 0
    %814 = vperm.xlu0 %813, %v608
    %v815 = vpop.permute.xlu0 %814
    %818 = vset.pattern.permute.xlu0 0
    %819 = vperm.xlu0 %818, %v609
    %v820 = vpop.permute.xlu0 %819
    %823 = vset.pattern.permute.xlu0 0
    %824 = vperm.xlu0 %823, %v610
    %v825 = vpop.permute.xlu0 %824
    %828 = vset.pattern.permute.xlu0 0
    %829 = vperm.xlu0 %828, %v611
    %v830 = vpop.permute.xlu0 %829
    %833 = vset.pattern.permute.xlu0 0
    %834 = vperm.xlu0 %833, %v612
    %v835 = vpop.permute.xlu0 %834
    %838 = vset.pattern.permute.xlu0 0
    %839 = vperm.xlu0 %838, %v613
    %v840 = vpop.permute.xlu0 %839
    %843 = vset.pattern.permute.xlu0 0
    %844 = vperm.xlu0 %843, %v614
    %v845 = vpop.permute.xlu0 %844
    %848 = vset.pattern.permute.xlu0 0
    %849 = vperm.xlu0 %848, %v615
    %v850 = vpop.permute.xlu0 %849
    %853 = vset.pattern.permute.xlu0 0
    %854 = vperm.xlu0 %853, %v616
    %v855 = vpop.permute.xlu0 %854
    %858 = vset.pattern.permute.xlu0 0
    %859 = vperm.xlu0 %858, %v617
    %v860 = vpop.permute.xlu0 %859
    %863 = vset.pattern.permute.xlu0 0
    %864 = vperm.xlu0 %863, %v618
    %v865 = vpop.permute.xlu0 %864
    %868 = vset.pattern.permute.xlu0 0
    %869 = vperm.xlu0 %868, %v619
    %v870 = vpop.permute.xlu0 %869
    %873 = vset.pattern.permute.xlu0 0
    %874 = vperm.xlu0 %873, %v620
    %v875 = vpop.permute.xlu0 %874
    %878 = vset.pattern.permute.xlu0 0
    %879 = vperm.xlu0 %878, %v621
    %v880 = vpop.permute.xlu0 %879
    %883 = vset.pattern.permute.xlu0 0
    %884 = vperm.xlu0 %883, %v622
    %v885 = vpop.permute.xlu0 %884
    %888 = vset.pattern.permute.xlu0 0
    %889 = vperm.xlu0 %888, %v623
    %v890 = vpop.permute.xlu0 %889
    %893 = vset.pattern.permute.xlu0 0
    %894 = vperm.xlu0 %893, %v624
    %v895 = vpop.permute.xlu0 %894
    %898 = vset.pattern.permute.xlu0 0
    %899 = vperm.xlu0 %898, %v625
    %v900 = vpop.permute.xlu0 %899
    %903 = vset.pattern.permute.xlu0 0
    %904 = vperm.xlu0 %903, %v626
    %v905 = vpop.permute.xlu0 %904
    %908 = vset.pattern.permute.xlu0 0
    %909 = vperm.xlu0 %908, %v627
    %v910 = vpop.permute.xlu0 %909
    %913 = vset.pattern.permute.xlu0 0
    %914 = vperm.xlu0 %913, %v628
    %v915 = vpop.permute.xlu0 %914
    %918 = vset.pattern.permute.xlu0 0
    %919 = vperm.xlu0 %918, %v629
    %v920 = vpop.permute.xlu0 %919
    %923 = vset.pattern.permute.xlu0 0
    %924 = vperm.xlu0 %923, %v630
    %v925 = vpop.permute.xlu0 %924
    %928 = vset.pattern.permute.xlu0 0
    %929 = vperm.xlu0 %928, %v631
    %v930 = vpop.permute.xlu0 %929
    %933 = vset.pattern.permute.xlu0 0
    %934 = vperm.xlu0 %933, %v632
    %v935 = vpop.permute.xlu0 %934
    %938 = vset.pattern.permute.xlu0 0
    %939 = vperm.xlu0 %938, %v633
    %v940 = vpop.permute.xlu0 %939
    %943 = vset.pattern.permute.xlu0 0
    %944 = vperm.xlu0 %943, %v634
    %v945 = vpop.permute.xlu0 %944
    %948 = vset.pattern.permute.xlu0 0
    %949 = vperm.xlu0 %948, %v635
    %v950 = vpop.permute.xlu0 %949
    %953 = vset.pattern.permute.xlu0 0
    %954 = vperm.xlu0 %953, %v636
    %v955 = vpop.permute.xlu0 %954
    %v957 = vperm.slane %v507, 1
    %v958 = vmul.f32 %v640, %v957
    %v959 = vmul.f32 %v645, %v957
    %v960 = vmul.f32 %v650, %v957
    %v961 = vmul.f32 %v655, %v957
    %v962 = vmul.f32 %v660, %v957
    %v963 = vmul.f32 %v665, %v957
    %v964 = vmul.f32 %v670, %v957
    %v965 = vmul.f32 %v675, %v957
    %v966 = vmul.f32 %v680, %v957
    %v967 = vmul.f32 %v685, %v957
    %v968 = vmul.f32 %v690, %v957
    %v969 = vmul.f32 %v695, %v957
    %v970 = vmul.f32 %v700, %v957
    %v971 = vmul.f32 %v705, %v957
    %v972 = vmul.f32 %v710, %v957
    %v973 = vmul.f32 %v715, %v957
    %v974 = vmul.f32 %v720, %v957
    %v975 = vmul.f32 %v725, %v957
    %v976 = vmul.f32 %v730, %v957
    %v977 = vmul.f32 %v735, %v957
    %v978 = vmul.f32 %v740, %v957
    %v979 = vmul.f32 %v745, %v957
    %v980 = vmul.f32 %v750, %v957
    %v981 = vmul.f32 %v755, %v957
    %v982 = vmul.f32 %v760, %v957
    %v983 = vmul.f32 %v765, %v957
    %v984 = vmul.f32 %v770, %v957
    %v985 = vmul.f32 %v775, %v957
    %v986 = vmul.f32 %v780, %v957
    %v987 = vmul.f32 %v785, %v957
    %v988 = vmul.f32 %v790, %v957
    %v989 = vmul.f32 %v795, %v957
    %v990 = vmul.f32 %v800, %v957
    %v991 = vmul.f32 %v805, %v957
    %v992 = vmul.f32 %v810, %v957
    %v993 = vmul.f32 %v815, %v957
    %v994 = vmul.f32 %v820, %v957
    %v995 = vmul.f32 %v825, %v957
    %v996 = vmul.f32 %v830, %v957
    %v997 = vmul.f32 %v835, %v957
    %v998 = vmul.f32 %v840, %v957
    %v999 = vmul.f32 %v845, %v957
    %v1000 = vmul.f32 %v850, %v957
    %v1001 = vmul.f32 %v855, %v957
    %v1002 = vmul.f32 %v860, %v957
    %v1003 = vmul.f32 %v865, %v957
    %v1004 = vmul.f32 %v870, %v957
    %v1005 = vmul.f32 %v875, %v957
    %v1006 = vmul.f32 %v880, %v957
    %v1007 = vmul.f32 %v885, %v957
    %v1008 = vmul.f32 %v890, %v957
    %v1009 = vmul.f32 %v895, %v957
    %v1010 = vmul.f32 %v900, %v957
    %v1011 = vmul.f32 %v905, %v957
    %v1012 = vmul.f32 %v910, %v957
    %v1013 = vmul.f32 %v915, %v957
    %v1014 = vmul.f32 %v920, %v957
    %v1015 = vmul.f32 %v925, %v957
    %v1016 = vmul.f32 %v930, %v957
    %v1017 = vmul.f32 %v935, %v957
    %v1018 = vmul.f32 %v940, %v957
    %v1019 = vmul.f32 %v945, %v957
    %v1020 = vmul.f32 %v950, %v957
    %v1021 = vmul.f32 %v955, %v957
    %v1022 = vadd.f32 %v509, %v958
    %v1023 = vadd.f32 %v510, %v959
    %v1024 = vadd.f32 %v511, %v960
    %v1025 = vadd.f32 %v512, %v961
    %v1026 = vadd.f32 %v513, %v962
    %v1027 = vadd.f32 %v514, %v963
    %v1028 = vadd.f32 %v515, %v964
    %v1029 = vadd.f32 %v516, %v965
    %v1030 = vadd.f32 %v517, %v966
    %v1031 = vadd.f32 %v518, %v967
    %v1032 = vadd.f32 %v519, %v968
    %v1033 = vadd.f32 %v520, %v969
    %v1034 = vadd.f32 %v521, %v970
    %v1035 = vadd.f32 %v522, %v971
    %v1036 = vadd.f32 %v523, %v972
    %v1037 = vadd.f32 %v524, %v973
    %v1038 = vadd.f32 %v525, %v974
    %v1039 = vadd.f32 %v526, %v975
    %v1040 = vadd.f32 %v527, %v976
    %v1041 = vadd.f32 %v528, %v977
    %v1042 = vadd.f32 %v529, %v978
    %v1043 = vadd.f32 %v530, %v979
    %v1044 = vadd.f32 %v531, %v980
    %v1045 = vadd.f32 %v532, %v981
    %v1046 = vadd.f32 %v533, %v982
    %v1047 = vadd.f32 %v534, %v983
    %v1048 = vadd.f32 %v535, %v984
    %v1049 = vadd.f32 %v536, %v985
    %v1050 = vadd.f32 %v537, %v986
    %v1051 = vadd.f32 %v538, %v987
    %v1052 = vadd.f32 %v539, %v988
    %v1053 = vadd.f32 %v540, %v989
    %v1054 = vadd.f32 %v541, %v990
    %v1055 = vadd.f32 %v542, %v991
    %v1056 = vadd.f32 %v543, %v992
    %v1057 = vadd.f32 %v544, %v993
    %v1058 = vadd.f32 %v545, %v994
    %v1059 = vadd.f32 %v546, %v995
    %v1060 = vadd.f32 %v547, %v996
    %v1061 = vadd.f32 %v548, %v997
    %v1062 = vadd.f32 %v549, %v998
    %v1063 = vadd.f32 %v550, %v999
    %v1064 = vadd.f32 %v551, %v1000
    %v1065 = vadd.f32 %v552, %v1001
    %v1066 = vadd.f32 %v553, %v1002
    %v1067 = vadd.f32 %v554, %v1003
    %v1068 = vadd.f32 %v555, %v1004
    %v1069 = vadd.f32 %v556, %v1005
    %v1070 = vadd.f32 %v557, %v1006
    %v1071 = vadd.f32 %v558, %v1007
    %v1072 = vadd.f32 %v559, %v1008
    %v1073 = vadd.f32 %v560, %v1009
    %v1074 = vadd.f32 %v561, %v1010
    %v1075 = vadd.f32 %v562, %v1011
    %v1076 = vadd.f32 %v563, %v1012
    %v1077 = vadd.f32 %v564, %v1013
    %v1078 = vadd.f32 %v565, %v1014
    %v1079 = vadd.f32 %v566, %v1015
    %v1080 = vadd.f32 %v567, %v1016
    %v1081 = vadd.f32 %v568, %v1017
    %v1082 = vadd.f32 %v569, %v1018
    %v1083 = vadd.f32 %v570, %v1019
    %v1084 = vadd.f32 %v571, %v1020
    %v1085 = vadd.f32 %v572, %v1021
    %v1086 = vperm.slane %v507, 2
    %v1087 = vadd.f32 %v1022, %v1086
    %v1088 = vadd.f32 %v1023, %v1086
    %v1089 = vadd.f32 %v1024, %v1086
    %v1090 = vadd.f32 %v1025, %v1086
    %v1091 = vadd.f32 %v1026, %v1086
    %v1092 = vadd.f32 %v1027, %v1086
    %v1093 = vadd.f32 %v1028, %v1086
    %v1094 = vadd.f32 %v1029, %v1086
    %v1095 = vadd.f32 %v1030, %v1086
    %v1096 = vadd.f32 %v1031, %v1086
    %v1097 = vadd.f32 %v1032, %v1086
    %v1098 = vadd.f32 %v1033, %v1086
    %v1099 = vadd.f32 %v1034, %v1086
    %v1100 = vadd.f32 %v1035, %v1086
    %v1101 = vadd.f32 %v1036, %v1086
    %v1102 = vadd.f32 %v1037, %v1086
    %v1103 = vadd.f32 %v1038, %v1086
    %v1104 = vadd.f32 %v1039, %v1086
    %v1105 = vadd.f32 %v1040, %v1086
    %v1106 = vadd.f32 %v1041, %v1086
    %v1107 = vadd.f32 %v1042, %v1086
    %v1108 = vadd.f32 %v1043, %v1086
    %v1109 = vadd.f32 %v1044, %v1086
    %v1110 = vadd.f32 %v1045, %v1086
    %v1111 = vadd.f32 %v1046, %v1086
    %v1112 = vadd.f32 %v1047, %v1086
    %v1113 = vadd.f32 %v1048, %v1086
    %v1114 = vadd.f32 %v1049, %v1086
    %v1115 = vadd.f32 %v1050, %v1086
    %v1116 = vadd.f32 %v1051, %v1086
    %v1117 = vadd.f32 %v1052, %v1086
    %v1118 = vadd.f32 %v1053, %v1086
    %v1119 = vadd.f32 %v1054, %v1086
    %v1120 = vadd.f32 %v1055, %v1086
    %v1121 = vadd.f32 %v1056, %v1086
    %v1122 = vadd.f32 %v1057, %v1086
    %v1123 = vadd.f32 %v1058, %v1086
    %v1124 = vadd.f32 %v1059, %v1086
    %v1125 = vadd.f32 %v1060, %v1086
    %v1126 = vadd.f32 %v1061, %v1086
    %v1127 = vadd.f32 %v1062, %v1086
    %v1128 = vadd.f32 %v1063, %v1086
    %v1129 = vadd.f32 %v1064, %v1086
    %v1130 = vadd.f32 %v1065, %v1086
    %v1131 = vadd.f32 %v1066, %v1086
    %v1132 = vadd.f32 %v1067, %v1086
    %v1133 = vadd.f32 %v1068, %v1086
    %v1134 = vadd.f32 %v1069, %v1086
    %v1135 = vadd.f32 %v1070, %v1086
    %v1136 = vadd.f32 %v1071, %v1086
    %v1137 = vadd.f32 %v1072, %v1086
    %v1138 = vadd.f32 %v1073, %v1086
    %v1139 = vadd.f32 %v1074, %v1086
    %v1140 = vadd.f32 %v1075, %v1086
    %v1141 = vadd.f32 %v1076, %v1086
    %v1142 = vadd.f32 %v1077, %v1086
    %v1143 = vadd.f32 %v1078, %v1086
    %v1144 = vadd.f32 %v1079, %v1086
    %v1145 = vadd.f32 %v1080, %v1086
    %v1146 = vadd.f32 %v1081, %v1086
    %v1147 = vadd.f32 %v1082, %v1086
    %v1148 = vadd.f32 %v1083, %v1086
    %v1149 = vadd.f32 %v1084, %v1086
    %v1150 = vadd.f32 %v1085, %v1086
    %1151 = vst [vmem:[#allocation2] sm:$0xff] %v1087
    %1152 = vst [vmem:[#allocation2 + $0x8] sm:$0xff] %v1088
    %1153 = vst [vmem:[#allocation2 + $0x10] sm:$0xff] %v1089
    %1154 = vst [vmem:[#allocation2 + $0x18] sm:$0xff] %v1090
    %1155 = vst [vmem:[#allocation2 + $0x20] sm:$0xff] %v1091
    %1156 = vst [vmem:[#allocation2 + $0x28] sm:$0xff] %v1092
    %1157 = vst [vmem:[#allocation2 + $0x30] sm:$0xff] %v1093
    %1158 = vst [vmem:[#allocation2 + $0x38] sm:$0xff] %v1094
    %1159 = vst [vmem:[#allocation2 + $0x40] sm:$0xff] %v1095
    %1160 = vst [vmem:[#allocation2 + $0x48] sm:$0xff] %v1096
    %1161 = vst [vmem:[#allocation2 + $0x50] sm:$0xff] %v1097
    %1162 = vst [vmem:[#allocation2 + $0x58] sm:$0xff] %v1098
    %1163 = vst [vmem:[#allocation2 + $0x60] sm:$0xff] %v1099
    %1164 = vst [vmem:[#allocation2 + $0x68] sm:$0xff] %v1100
    %1165 = vst [vmem:[#allocation2 + $0x70] sm:$0xff] %v1101
    %1166 = vst [vmem:[#allocation2 + $0x78] sm:$0xff] %v1102
    %1167 = vst [vmem:[#allocation2 + $0x80] sm:$0xff] %v1103
    %1168 = vst [vmem:[#allocation2 + $0x88] sm:$0xff] %v1104
    %1169 = vst [vmem:[#allocation2 + $0x90] sm:$0xff] %v1105
    %1170 = vst [vmem:[#allocation2 + $0x98] sm:$0xff] %v1106
    %1171 = vst [vmem:[#allocation2 + $0xa0] sm:$0xff] %v1107
    %1172 = vst [vmem:[#allocation2 + $0xa8] sm:$0xff] %v1108
    %1173 = vst [vmem:[#allocation2 + $0xb0] sm:$0xff] %v1109
    %1174 = vst [vmem:[#allocation2 + $0xb8] sm:$0xff] %v1110
    %1175 = vst [vmem:[#allocation2 + $0xc0] sm:$0xff] %v1111
    %1176 = vst [vmem:[#allocation2 + $0xc8] sm:$0xff] %v1112
    %1177 = vst [vmem:[#allocation2 + $0xd0] sm:$0xff] %v1113
    %1178 = vst [vmem:[#allocation2 + $0xd8] sm:$0xff] %v1114
    %1179 = vst [vmem:[#allocation2 + $0xe0] sm:$0xff] %v1115
    %1180 = vst [vmem:[#allocation2 + $0xe8] sm:$0xff] %v1116
    %1181 = vst [vmem:[#allocation2 + $0xf0] sm:$0xff] %v1117
    %1182 = vst [vmem:[#allocation2 + $0xf8] sm:$0xff] %v1118
    %1183 = vst [vmem:[#allocation2 + $0x100] sm:$0xff] %v1119
    %1184 = vst [vmem:[#allocation2 + $0x108] sm:$0xff] %v1120
    %1185 = vst [vmem:[#allocation2 + $0x110] sm:$0xff] %v1121
    %1186 = vst [vmem:[#allocation2 + $0x118] sm:$0xff] %v1122
    %1187 = vst [vmem:[#allocation2 + $0x120] sm:$0xff] %v1123
    %1188 = vst [vmem:[#allocation2 + $0x128] sm:$0xff] %v1124
    %1189 = vst [vmem:[#allocation2 + $0x130] sm:$0xff] %v1125
    %1190 = vst [vmem:[#allocation2 + $0x138] sm:$0xff] %v1126
    %1191 = vst [vmem:[#allocation2 + $0x140] sm:$0xff] %v1127
    %1192 = vst [vmem:[#allocation2 + $0x148] sm:$0xff] %v1128
    %1193 = vst [vmem:[#allocation2 + $0x150] sm:$0xff] %v1129
    %1194 = vst [vmem:[#allocation2 + $0x158] sm:$0xff] %v1130
    %1195 = vst [vmem:[#allocation2 + $0x160] sm:$0xff] %v1131
    %1196 = vst [vmem:[#allocation2 + $0x168] sm:$0xff] %v1132
    %1197 = vst [vmem:[#allocation2 + $0x170] sm:$0xff] %v1133
    %1198 = vst [vmem:[#allocation2 + $0x178] sm:$0xff] %v1134
    %1199 = vst [vmem:[#allocation2 + $0x180] sm:$0xff] %v1135
    %1200 = vst [vmem:[#allocation2 + $0x188] sm:$0xff] %v1136
    %1201 = vst [vmem:[#allocation2 + $0x190] sm:$0xff] %v1137
    %1202 = vst [vmem:[#allocation2 + $0x198] sm:$0xff] %v1138
    %1203 = vst [vmem:[#allocation2 + $0x1a0] sm:$0xff] %v1139
    %1204 = vst [vmem:[#allocation2 + $0x1a8] sm:$0xff] %v1140
    %1205 = vst [vmem:[#allocation2 + $0x1b0] sm:$0xff] %v1141
    %1206 = vst [vmem:[#allocation2 + $0x1b8] sm:$0xff] %v1142
    %1207 = vst [vmem:[#allocation2 + $0x1c0] sm:$0xff] %v1143
    %1208 = vst [vmem:[#allocation2 + $0x1c8] sm:$0xff] %v1144
    %1209 = vst [vmem:[#allocation2 + $0x1d0] sm:$0xff] %v1145
    %1210 = vst [vmem:[#allocation2 + $0x1d8] sm:$0xff] %v1146
    %1211 = vst [vmem:[#allocation2 + $0x1e0] sm:$0xff] %v1147
    %1212 = vst [vmem:[#allocation2 + $0x1e8] sm:$0xff] %v1148
    %1213 = vst [vmem:[#allocation2 + $0x1f0] sm:$0xff] %v1149
    %1214 = vst [vmem:[#allocation2 + $0x1f8] sm:$0xff] %v1150
    // Predicated region
    $region18: #{tpu_custom_call.1} parent=1 // pred_check
      _
    $region19: #{tpu_custom_call.1} parent=1 // pred_check_branch
      %1216 = sbr.rel (0) target = $region21
    $region20: #{tpu_custom_call.1} parent=1 // pred_region
      %1218 = vsyncadd [#allocation3], 0
      %s1219 = sshll.u32 [#allocation2], 4
      %s1220 = int_to_ptr.vmem [resolvable:$true] %s1219
      %s1221 = sshll.u32 %s4, 4
      %s1222 = int_to_ptr.hbm [resolvable:$true] %s1221
      %1227 = dma.vmem_to_hbm [thread:$0]  %s1220, 8192, %s1222, [#allocation3], 128, 128, 8
    $region21: #{tpu_custom_call.1} parent=1 // pred_fallthru
      _
    // Predicated region
    $region22: #{tpu_custom_call.1} parent=1 // pred_check
      _
    $region23: #{tpu_custom_call.1} parent=1 // pred_check_branch
      %1229 = sbr.rel (0) target = $region25
    $region24: #{tpu_custom_call.1} parent=1 // pred_region
      %1231 = dma.done [#allocation3], 8192
    $region25: #{tpu_custom_call.1} parent=1 // pred_fallthru
      _
    %1232 = vsyncpa [#allocation3], 1

</llo_original>
